<compile_context>
chip_gen: v6e
topology: v6e:2x2x1
jax: 0.10.0
libtpu: 0.0.40
codegen_flags: <defaults>
</compile_context>

<pallas_src>
import numpy as np
import jax
import jax.numpy as jnp
from jax.experimental import pallas as pl
from jax.experimental.pallas import tpu as pltpu


_LANE_WIDTH = 1536                 # 4 * lcm(3, 128): lane-dense & xyz-phase aligned
_MIN_BLOCK_ROWS = 128              # >= 0.75 MiB f32 per grid step
_PALLAS_MIN_ELEMS = 256 * 1024     # below ~1 MiB, XLA's fused FMA wins


def _round_up(x, m):
    return ((x + m - 1) // m) * m


def _cdiv(a, b):
    return -(-a // b)


def _default_tiling():
    """(block_rows, vmem_limit_bytes) tuned per TPU generation."""
    vmem_cap = None
    try:
        vmem_cap = getattr(pltpu.get_tpu_info(), "vmem_capacity_bytes", None)
    except Exception:
        vmem_cap = None
    if vmem_cap is not None and vmem_cap >= 100 * 1024 * 1024:
        # v5e / v6e: 128 MiB physical VMEM -> bigger tiles + raised scoped limit.
        return 1024, 64 * 1024 * 1024
    # v7x (64 MiB physical VMEM) or unknown: conservative tile + 32 MiB limit.
    return 512, 32 * 1024 * 1024


def _warp_kernel(x_ref, scale_ref, trans_ref, o_ref):
    # x_ref:     (tm, L) lane-dense coordinate slab (xyz interleaved, period 3)
    # scale_ref: (1, L)  pre-tiled multiplier, VMEM-resident (constant index_map)
    # trans_ref: (1, L)  pre-tiled offset,     VMEM-resident (constant index_map)
    x = x_ref[...].astype(jnp.float32)
    o_ref[...] = (x * scale_ref[...] + trans_ref[...]).astype(o_ref.dtype)


def _factor_row(v, L):
    """(1, L) f32 row with value[c % 3] in column c; numpy (constant) when static."""
    if isinstance(v, (list, tuple, float, int, np.ndarray)):
        vec = np.asarray(v, dtype=np.float32).reshape(3)
        return jnp.asarray(np.tile(vec, L // 3).reshape(1, L))
    vec = jnp.asarray(v, dtype=jnp.float32).reshape(3)
    return jnp.tile(vec, L // 3).reshape(1, L)


def uniform_box_warp(coordinates, scales, trans, *, block_rows=None,
                     vmem_limit_bytes=None, min_pallas_elems=_PALLAS_MIN_ELEMS):
    """out = coordinates * scales + trans, broadcasting over the last (xyz) dim."""
    assert coordinates.shape[-1] == 3, "last dimension must be xyz=3"

    # Stream dtype: keep f32/bf16/f16 as-is (kernel is HBM-bandwidth bound);
    # anything else (f64 under x64, ints) is computed and stored in f32.
    if coordinates.dtype in (jnp.float32, jnp.bfloat16, jnp.float16):
        x = coordinates
    else:
        x = coordinates.astype(jnp.float32)
    out_dtype = x.dtype

    total = x.size
    if total < min_pallas_elems:
        # Tiny input: pallas_call fixed overhead dwarfs 3*N floats of FMA work.
        s3 = jnp.asarray(scales, jnp.float32).reshape(3)
        t3 = jnp.asarray(trans, jnp.float32).reshape(3)
        return (x.astype(jnp.float32) * s3 + t3).astype(out_dtype)

    L = _LANE_WIDTH
    auto_rows, auto_vmem = _default_tiling()
    if block_rows is None:
        block_rows = auto_rows
    if vmem_limit_bytes is None:
        vmem_limit_bytes = auto_vmem
    block_rows = max(_MIN_BLOCK_ROWS, _round_up(int(block_rows), 8))

    # Lane-dense flatten (free: contiguous reshape) + pad at most L-1 elements.
    m_rows = _cdiv(total, L)
    pad_amt = m_rows * L - total
    flat = x.reshape(-1)
    if pad_amt:
        flat = jnp.pad(flat, (0, pad_amt))   # fused into the input DMA (allow_input_fusion)
    x2d = flat.reshape(m_rows, L)

    # Block rows: cap at the data, keep >= _MIN_BLOCK_ROWS, and ensure >= 2 grid
    # steps (v7x has two TensorCores) whenever both halves stay big enough.
    tm = min(block_rows, _round_up(m_rows, 8))
    if m_rows >= 2 * _MIN_BLOCK_ROWS:
        tm = min(tm, max(_MIN_BLOCK_ROWS, _round_up(_cdiv(m_rows, 2), 8)))
    grid = (_cdiv(m_rows, tm),)

    scale_row = _factor_row(scales, L)
    trans_row = _factor_row(trans, L)

    out2d = pl.pallas_call(
        _warp_kernel,
        out_shape=jax.ShapeDtypeStruct((m_rows, L), out_dtype),
        grid_spec=pltpu.PrefetchScalarGridSpec(
            num_scalar_prefetch=0,
            grid=grid,
            in_specs=[
                pl.BlockSpec((tm, L), lambda i: (i, 0)),
                pl.BlockSpec((1, L), lambda i: (0, 0)),   # resident: constant block index
                pl.BlockSpec((1, L), lambda i: (0, 0)),   # resident: constant block index
            ],
            out_specs=pl.BlockSpec((tm, L), lambda i: (i, 0)),
        ),
        compiler_params=pltpu.CompilerParams(
            dimension_semantics=("parallel",),
            vmem_limit_bytes=int(vmem_limit_bytes),
            allow_input_fusion=[True, False, False],
        ),
    )(x2d, scale_row, trans_row)

    if pad_amt:
        # Only the ragged case pays one post-kernel slice pass.
        return out2d.reshape(-1)[:total].reshape(coordinates.shape)
    return out2d.reshape(coordinates.shape)


if __name__ == "__main__":
    key = jax.random.PRNGKey(0)
    # Deterministic "module parameters" (module __init__ args)
    scales = [2.0, 0.5, 1.5]
    trans = [0.1, -0.2, 0.3]
    scale_v = jnp.asarray(scales, jnp.float32)
    trans_v = jnp.asarray(trans, jnp.float32)
    k1, k2, k3 = jax.random.split(key, 3)

    # 1) Ragged total (not a multiple of 1536): fused tail pad, >=2 parallel grid
    #    steps, partial final block, post-kernel slice.  Static-constant factors.
    coords_a = jax.random.normal(k1, (2, 66000, 3), dtype=jnp.float32)
    out_a = jax.block_until_ready(
        uniform_box_warp(coords_a, scales, trans, min_pallas_elems=0))
    ref_a = coords_a * scale_v.reshape(1, 1, 3) + trans_v.reshape(1, 1, 3)
    assert out_a.shape == coords_a.shape and out_a.dtype == coords_a.dtype
    assert jnp.allclose(out_a, ref_a, atol=1e-6, rtol=1e-6)

    # 2) Exact multiple of 1536 (copy-free path: no pad, no slice), traced
    #    jnp-array factors, 2-D (N, 3) input.
    coords_b = jax.random.normal(k2, (8192, 3), dtype=jnp.float32)
    out_b = jax.block_until_ready(
        uniform_box_warp(coords_b, scale_v, trans_v, min_pallas_elems=0))
    ref_b = coords_b * scale_v.reshape(1, 3) + trans_v.reshape(1, 3)
    assert out_b.shape == coords_b.shape
    assert jnp.allclose(out_b, ref_b, atol=1e-6, rtol=1e-6)

    # 3) bf16 stream-dtype passthrough (f32 FMA in-kernel, bf16 store).
    coords_c = jax.random.normal(k3, (4096, 3), dtype=jnp.float32).astype(jnp.bfloat16)
    out_c = jax.block_until_ready(
        uniform_box_warp(coords_c, scales, trans, min_pallas_elems=0))
    ref_c = (coords_c.astype(jnp.float32) * scale_v + trans_v).astype(jnp.bfloat16)
    assert out_c.dtype == jnp.bfloat16 and out_c.shape == coords_c.shape
    assert jnp.allclose(out_c.astype(jnp.float32), ref_c.astype(jnp.float32), atol=1e-2)

    # 4) Tiny input (original small test shape): fast non-Pallas fallback.
    coords_d = jax.random.normal(key, (2, 16, 3), dtype=jnp.float32)
    out_d = jax.block_until_ready(uniform_box_warp(coords_d, scales, trans))
    ref_d = coords_d * scale_v.reshape(1, 1, 3) + trans_v.reshape(1, 1, 3)
    assert out_d.shape == coords_d.shape
    assert jnp.allclose(out_d, ref_d, atol=1e-6, rtol=1e-6)

    print("KERNEL_OK")
</pallas_src>

<mosaic_0001>
module attributes {stable_mosaic.version = 11 : i64} {
  func.func @_warp_kernel(%arg0: i32, %arg1: memref<136x1536xf32, #tpu.memory_space<vmem>>, %arg2: memref<1x1536xf32, #tpu.memory_space<vmem>>, %arg3: memref<1x1536xf32, #tpu.memory_space<vmem>>, %arg4: memref<136x1536xf32, #tpu.memory_space<vmem>>) attributes {dimension_semantics = [#tpu.dimension_semantics<parallel>], iteration_bounds = array<i64: 2>, scalar_prefetch = 0 : i64, scratch_operands = 0 : i64, tpu.core_type = #tpu.core_type<tc>, window_params = [{transform_indices = @transform_0, window_bounds = array<i64: 136, 1536>}, {pipeline_mode = #tpu.pipeline_mode<synchronous>, transform_indices = @transform_1, window_bounds = array<i64: 1, 1536>}, {pipeline_mode = #tpu.pipeline_mode<synchronous>, transform_indices = @transform_2, window_bounds = array<i64: 1, 1536>}, {transform_indices = @transform_3, window_bounds = array<i64: 136, 1536>}]} {
    %c0 = arith.constant 0 : index
    %c0_0 = arith.constant 0 : index
    %0 = vector.load %arg1[%c0, %c0_0] : memref<136x1536xf32, #tpu.memory_space<vmem>>, vector<136x1536xf32>
    %c0_1 = arith.constant 0 : index
    %c0_2 = arith.constant 0 : index
    %1 = vector.load %arg2[%c0_1, %c0_2] : memref<1x1536xf32, #tpu.memory_space<vmem>>, vector<1x1536xf32>
    %2 = vector.broadcast %1 : vector<1x1536xf32> to vector<136x1536xf32>
    %3 = arith.mulf %0, %2 : vector<136x1536xf32>
    %c0_3 = arith.constant 0 : index
    %c0_4 = arith.constant 0 : index
    %4 = vector.load %arg3[%c0_3, %c0_4] : memref<1x1536xf32, #tpu.memory_space<vmem>>, vector<1x1536xf32>
    %5 = vector.broadcast %4 : vector<1x1536xf32> to vector<136x1536xf32>
    %6 = arith.addf %3, %5 : vector<136x1536xf32>
    %c0_5 = arith.constant 0 : index
    %c0_6 = arith.constant 0 : index
    %7 = vector.load %arg4[%c0_5, %c0_6] : memref<136x1536xf32, #tpu.memory_space<vmem>>, vector<136x1536xf32>
    tpu.vector_store %arg4[%c0_5, %c0_6], %6 {strides = array<i32>} : memref<136x1536xf32, #tpu.memory_space<vmem>>, vector<136x1536xf32>,
    return
  }
  func.func @transform_0(%arg0: i32) -> (i32, i32) {
    %c0_i32 = arith.constant 0 : i32
    %c0_i32_0 = arith.constant 0 : i32
    return %arg0, %c0_i32 : i32, i32
  }
  func.func @transform_1(%arg0: i32) -> (i32, i32) {
    %c0_i32 = arith.constant 0 : i32
    %c0_i32_0 = arith.constant 0 : i32
    %c0_i32_1 = arith.constant 0 : i32
    return %c0_i32, %c0_i32_0 : i32, i32
  }
  func.func @transform_2(%arg0: i32) -> (i32, i32) {
    %c0_i32 = arith.constant 0 : i32
    %c0_i32_0 = arith.constant 0 : i32
    %c0_i32_1 = arith.constant 0 : i32
    return %c0_i32, %c0_i32_0 : i32, i32
  }
  func.func @transform_3(%arg0: i32) -> (i32, i32) {
    %c0_i32 = arith.constant 0 : i32
    %c0_i32_0 = arith.constant 0 : i32
    return %arg0, %c0_i32 : i32, i32
  }
}

</mosaic_0001>

<llo_original>
// kernel: tpu_custom_call.1
$region0: #{tpu_custom_call.1}
  #allocation0 [shape = 'u32[]', space=smem, size = 0x4, offset = 0x4, fixed_abs, tag = 'smem constant byte address 0x4 - core index']
  #allocation1 [shape = 'u32[144,128]{1,0:T(1,128)}', space=vmem, size = 0x12000, scoped, tag = 'internal scratch']
  %s0 = inlined_call_operand.hbm [shape: f32[258,1536], index: 0, kind: input, shape index: {}]
  %s1 = inlined_call_operand.hbm [shape: f32[1,1536], index: 1, kind: input, shape index: {}]
  %s2 = inlined_call_operand.hbm [shape: f32[1,1536], index: 2, kind: input, shape index: {}]
  %s3 = inlined_call_operand.hbm [shape: f32[258,1536], index: 3, kind: output, shape index: {}]
  %s4 = sld [smem:[#allocation0]]
  $region57: #{tpu_custom_call.1} parent=0
    _
  %s6 = ssub.s32 1, %s4
  %s7 = scalar_select 0, %s6, %s4
  $region1: #{tpu_custom_call.1} parent=0
    #allocation2 [shape = 'u8[1671168]{0}', space=vmem, size = 0x198000, scoped, tag = 'input window, operand 0']
    #allocation3 [shape = 's32[2]{0}', space=sflag, size = 0x8, scoped, tag = 'scoped memory for tpu_custom_call.1']
    #allocation4 [shape = 's32[2]{0}', space=sflag, size = 0x8, scoped, tag = 'scoped memory for tpu_custom_call.1']
    #allocation5 [shape = 'u8[6144]{0}', space=vmem, size = 0x1800, scoped, tag = 'input window, operand 1, single buffered']
    #allocation6 [shape = 's32[1]{0}', space=sflag, size = 0x4, scoped, tag = 'scoped memory for tpu_custom_call.1']
    #allocation7 [shape = 'u8[6144]{0}', space=vmem, size = 0x1800, scoped, tag = 'input window, operand 2, single buffered']
    #allocation8 [shape = 'u8[1671168]{0}', space=vmem, size = 0x198000, scoped, tag = 'output window, operand 0']
    %8 = vsyncpa [#allocation3], 0
    %s9 = scalar_lea.sflag [#allocation3], 1
    %10 = vsyncpa %s9, 0
    %11 = vsyncpa [#allocation6], 0
    %12 = vsyncpa [#allocation4], 0
    %s13 = scalar_lea.sflag [#allocation4], 1
    %14 = vsyncpa %s13, 0
    loop: start=0, step=1, limit=4
    $region2: #{tpu_custom_call.1} parent=1 // loop_pre_header
      _
    $region3: #{tpu_custom_call.1} parent=1 // loop_header
      %s16 = sphi 0, %s20
      %p17 = scmp.ge.s32.totalorder %s16, 4
      %s26 = sphi 0, %s28
      %s29 = sphi 0, %s26
      %s30 = sphi 0, %s29
      %s46 = sphi 0, %s30
      %s50 = sphi 0, %s50
      %s52 = sphi 0, %s50
      %s53 = sphi 0, %s52
      %s67 = sphi 0, %s53
      %s71 = sphi 0, %s71
      %s73 = sphi 0, %s71
      %s74 = sphi 0, %s73
      %s88 = sphi 0, %s74
      %s94 = sphi 0, %s96
      %s97 = sphi 0, %s94
      %s98 = sphi 0, %s97
      %s114 = sphi 0, %s98
    $region4: #{tpu_custom_call.1} parent=1 // loop_header_branch
      %19 = sbr.rel (%p17) target = $region8
    $region5: #{tpu_custom_call.1} parent=1 // loop_body
      %s21 = ssub.s32 %s16, 1
      %s22 = ssub.s32 %s16, 2
      %s23 = sadd.s32 %s16, 1
      %s24 = ssub.s32 %s16, %s23
      %p25 = scmp.eq.s32.totalorder %s24, 0
      %s27 = sadd.s32 %s26, 1
      %s28 = scalar_select %p25, %s26, %s27
      %p31 = pneg %p25
      %p32 = scmp.eq.s32.totalorder %s16, 1
      %p33 = por %p31, %p32
      %p34 = scmp.ne.s32.totalorder %s26, %s29
      %p35 = scmp.eq.s32.totalorder %s16, 0
      %p36 = por %p34, %p35
      %p37 = scmp.ne.s32.totalorder %s26, %s29
      %p38 = scmp.eq.s32.totalorder %s21, 1
      %p39 = por %p37, %p38
      %p40 = scmp.ne.s32.totalorder %s29, %s30
      %p41 = scmp.eq.s32.totalorder %s21, 0
      %p42 = por %p40, %p41
      %p43 = scmp.ne.s32.totalorder %s29, %s30
      %p44 = scmp.eq.s32.totalorder %s22, 1
      %p45 = por %p43, %p44
      %p47 = scmp.ne.s32.totalorder %s30, %s46
      %p48 = scmp.eq.s32.totalorder %s22, 0
      %p49 = por %p47, %p48
      %s51 = sadd.s32 %s50, 1
      %p54 = scmp.eq.s32.totalorder %s16, 1
      %p55 = scmp.ne.s32.totalorder %s50, %s52
      %p56 = scmp.eq.s32.totalorder %s16, 0
      %p57 = por %p55, %p56
      %p58 = scmp.ne.s32.totalorder %s50, %s52
      %p59 = scmp.eq.s32.totalorder %s21, 1
      %p60 = por %p58, %p59
      %p61 = scmp.ne.s32.totalorder %s52, %s53
      %p62 = scmp.eq.s32.totalorder %s21, 0
      %p63 = por %p61, %p62
      %p64 = scmp.ne.s32.totalorder %s52, %s53
      %p65 = scmp.eq.s32.totalorder %s22, 1
      %p66 = por %p64, %p65
      %p68 = scmp.ne.s32.totalorder %s53, %s67
      %p69 = scmp.eq.s32.totalorder %s22, 0
      %p70 = por %p68, %p69
      %s72 = sadd.s32 %s71, 1
      %p75 = scmp.eq.s32.totalorder %s16, 1
      %p76 = scmp.ne.s32.totalorder %s71, %s73
      %p77 = scmp.eq.s32.totalorder %s16, 0
      %p78 = por %p76, %p77
      %p79 = scmp.ne.s32.totalorder %s71, %s73
      %p80 = scmp.eq.s32.totalorder %s21, 1
      %p81 = por %p79, %p80
      %p82 = scmp.ne.s32.totalorder %s73, %s74
      %p83 = scmp.eq.s32.totalorder %s21, 0
      %p84 = por %p82, %p83
      %p85 = scmp.ne.s32.totalorder %s73, %s74
      %p86 = scmp.eq.s32.totalorder %s22, 1
      %p87 = por %p85, %p86
      %p89 = scmp.ne.s32.totalorder %s74, %s88
      %p90 = scmp.eq.s32.totalorder %s22, 0
      %p91 = por %p89, %p90
      %s92 = ssub.s32 %s16, %s23
      %p93 = scmp.eq.s32.totalorder %s92, 0
      %s95 = sadd.s32 %s94, 1
      %s96 = scalar_select %p93, %s94, %s95
      %p99 = pneg %p93
      %p100 = scmp.eq.s32.totalorder %s16, 1
      %p101 = por %p99, %p100
      %p102 = scmp.ne.s32.totalorder %s94, %s97
      %p103 = scmp.eq.s32.totalorder %s16, 0
      %p104 = por %p102, %p103
      %p105 = scmp.ne.s32.totalorder %s94, %s97
      %p106 = scmp.eq.s32.totalorder %s21, 1
      %p107 = por %p105, %p106
      %p108 = scmp.ne.s32.totalorder %s97, %s98
      %p109 = scmp.eq.s32.totalorder %s21, 0
      %p110 = por %p108, %p109
      %p111 = scmp.ne.s32.totalorder %s97, %s98
      %p112 = scmp.eq.s32.totalorder %s22, 1
      %p113 = por %p111, %p112
      %p115 = scmp.ne.s32.totalorder %s98, %s114
      %p116 = scmp.eq.s32.totalorder %s22, 0
      %p117 = por %p115, %p116
      %p118 = scmp.le.s32.totalorder 1, %s16
      %p119 = scmp.lt.s32.totalorder %s16, 3
      %p120 = pnand %p118, %p119
      %p121 = pneg %p120
      // Predicated region
      $region9: #{tpu_custom_call.1} parent=5 // pred_check
        _
      $region10: #{tpu_custom_call.1} parent=5 // pred_check_branch
        %123 = sbr.rel (%p120) target = $region12
      $region11: #{tpu_custom_call.1} parent=5 // pred_region
        %s124 = ssub.s32 %s16, 1
        // Predicated region
        $region13: #{tpu_custom_call.1} parent=11 // pred_check
          %p125 = pneg %p63
        $region14: #{tpu_custom_call.1} parent=11 // pred_check_branch
          %127 = sbr.rel (%p125) target = $region16
        $region15: #{tpu_custom_call.1} parent=11 // pred_region
          %s129 = ssub.s32 192, 192
          %130 = vsyncadd [#allocation6], %s129
          %s132 = sshll.u32 [#allocation5], 4
          %s133 = int_to_ptr.vmem [resolvable:$true] %s132
          %135 = dma.hbm_to_vmem [thread:$0]  %s1, 192, %s133, [#allocation6]
        $region16: #{tpu_custom_call.1} parent=11 // pred_fallthru
          _
        // Predicated region
        $region17: #{tpu_custom_call.1} parent=11 // pred_check
          %p136 = pneg %p84
        $region18: #{tpu_custom_call.1} parent=11 // pred_check_branch
          %138 = sbr.rel (%p136) target = $region20
        $region19: #{tpu_custom_call.1} parent=11 // pred_region
          %s140 = ssub.s32 192, 192
          %141 = vsyncadd [#allocation6], %s140
          %s143 = sshll.u32 [#allocation7], 4
          %s144 = int_to_ptr.vmem [resolvable:$true] %s143
          %146 = dma.hbm_to_vmem [thread:$0]  %s2, 192, %s144, [#allocation6]
        $region20: #{tpu_custom_call.1} parent=11 // pred_fallthru
          _
      $region12: #{tpu_custom_call.1} parent=5 // pred_fallthru
        _
      %p147 = scmp.lt.s32.totalorder %s16, 2
      // Predicated region
      $region21: #{tpu_custom_call.1} parent=5 // pred_check
        %p148 = pneg %p147
      $region22: #{tpu_custom_call.1} parent=5 // pred_check_branch
        %150 = sbr.rel (%p148) target = $region24
      $region23: #{tpu_custom_call.1} parent=5 // pred_region
        // Predicated region
        $region25: #{tpu_custom_call.1} parent=23 // pred_check
          %p151 = pneg %p36
        $region26: #{tpu_custom_call.1} parent=23 // pred_check_branch
          %153 = sbr.rel (%p151) target = $region28
        $region27: #{tpu_custom_call.1} parent=23 // pred_region
          %s154 = sand.u32 %s26, 1
          %s155 = scalar_lea.sflag [#allocation3], %s154
          %s156 = sand.u32 %s26, 1
          %s157 = smul.addr %s156, 1632
          %s158 = scalar_lea.vmem [#allocation2], %s157
          %s159 = smul.u32 17, %s16
          %s160 = ssub.s32 33, %s159
          %p161 = scmp.lt.s32.totalorder %s160, 17
          %s162 = scalar_select %p161, %s160, 17
          %s163 = smul.u32 128, %s162
          %s164 = smul.u32 %s163, 12
          %s166 = ssub.s32 26112, %s164
          %167 = vsyncadd %s155, %s166
          %p168 = scmp.ne.s32.totalorder 0, %s164
          %s169 = smul.addr %s159, 12
          %s170 = smul.addr %s169, 128
          %s171 = scalar_lea.hbm %s0, %s170
          %s172 = smul.u32 96, %s162
          %s173 = sshll.u32 %s158, 4
          %s174 = int_to_ptr.vmem [resolvable:$true] %s173
          %s175 = sshll.u32 %s172, 4
          %179 = dma.hbm_to_vmem [thread:$0]  (%p168), %s171, %s175, %s174, %s155, 1536, 1536, 96
        $region28: #{tpu_custom_call.1} parent=23 // pred_fallthru
          _
      $region24: #{tpu_custom_call.1} parent=5 // pred_fallthru
        _
      %p180 = scmp.le.s32.totalorder 1, %s16
      %p181 = scmp.lt.s32.totalorder %s16, 3
      %p182 = pnand %p180, %p181
      %p183 = pneg %p182
      // Predicated region
      $region29: #{tpu_custom_call.1} parent=5 // pred_check
        _
      $region30: #{tpu_custom_call.1} parent=5 // pred_check_branch
        %185 = sbr.rel (%p182) target = $region32
      $region31: #{tpu_custom_call.1} parent=5 // pred_region
        %s186 = ssub.s32 %s16, 1
        %s187 = sand.u32 %s29, 1
        %s188 = scalar_lea.sflag [#allocation3], %s187
        %s189 = sand.u32 %s29, 1
        %s190 = smul.addr %s189, 1632
        %s191 = scalar_lea.vmem [#allocation2], %s190
        // Predicated region
        $region33: #{tpu_custom_call.1} parent=31 // pred_check
          %p192 = pneg %p42
        $region34: #{tpu_custom_call.1} parent=31 // pred_check_branch
          %194 = sbr.rel (%p192) target = $region36
        $region35: #{tpu_custom_call.1} parent=31 // pred_region
          %195 = dma.done %s188, 26112
        $region36: #{tpu_custom_call.1} parent=31 // pred_fallthru
          _
        // Predicated region
        $region37: #{tpu_custom_call.1} parent=31 // pred_check
          %p196 = pneg %p63
        $region38: #{tpu_custom_call.1} parent=31 // pred_check_branch
          %198 = sbr.rel (%p196) target = $region40
        $region39: #{tpu_custom_call.1} parent=31 // pred_region
          %199 = dma.done [#allocation6], 192
        $region40: #{tpu_custom_call.1} parent=31 // pred_fallthru
          _
        // Predicated region
        $region41: #{tpu_custom_call.1} parent=31 // pred_check
          %p200 = pneg %p84
        $region42: #{tpu_custom_call.1} parent=31 // pred_check_branch
          %202 = sbr.rel (%p200) target = $region44
        $region43: #{tpu_custom_call.1} parent=31 // pred_region
          %203 = dma.done [#allocation6], 192
        $region44: #{tpu_custom_call.1} parent=31 // pred_fallthru
          _
        %s204 = sand.u32 %s29, 1
        %s205 = scalar_lea.sflag [#allocation3], %s204
        %s206 = sand.u32 %s29, 1
        %s207 = smul.addr %s206, 1632
        %s208 = scalar_lea.vmem [#allocation2], %s207
        %p209 = pneg %p42
        %p210 = pneg %p39
        %p211 = pneg %p63
        %p212 = pneg %p60
        %p213 = pneg %p84
        %p214 = pneg %p81
        %p215 = pneg %p110
        %p216 = pneg %p107
        %s217 = sand.u32 %s97, 1
        %s218 = scalar_lea.sflag [#allocation4], %s217
        %s219 = sand.u32 %s97, 1
        %s220 = smul.addr %s219, 1632
        %s221 = scalar_lea.vmem [#allocation8], %s220
        %s222 = smul.u32 17, %s21
        %s223 = ssub.s32 33, %s222
        %p224 = scmp.lt.s32.totalorder %s223, 17
        %s225 = scalar_select %p224, %s223, 17
        %s226 = smul.u32 128, %s225
        %s227 = smul.u32 %s226, 12
        %s228 = smul.u32 17, %s21
        %s229 = ssub.s32 33, %s228
        %p230 = scmp.lt.s32.totalorder %s229, 17
        %s231 = scalar_select %p230, %s229, 17
        %s232 = smul.u32 128, %s231
        %s233 = smul.u32 %s232, 12
        %v234 = vld [vmem:[%s191] sm:$0xff]
        %v235 = vld [vmem:[%s191 + $0x8] sm:$0xff]
        %v236 = vld [vmem:[%s191 + $0x10] sm:$0xff]
        %v237 = vld [vmem:[%s191 + $0x18] sm:$0xff]
        %v238 = vld [vmem:[%s191 + $0x20] sm:$0xff]
        %v239 = vld [vmem:[%s191 + $0x28] sm:$0xff]
        %v240 = vld [vmem:[%s191 + $0x30] sm:$0xff]
        %v241 = vld [vmem:[%s191 + $0x38] sm:$0xff]
        %v242 = vld [vmem:[%s191 + $0x40] sm:$0xff]
        %v243 = vld [vmem:[%s191 + $0x48] sm:$0xff]
        %v244 = vld [vmem:[%s191 + $0x50] sm:$0xff]
        %v245 = vld [vmem:[%s191 + $0x58] sm:$0xff]
        %v246 = vld [vmem:[%s191 + $0x60] sm:$0xff]
        %v247 = vld [vmem:[%s191 + $0x68] sm:$0xff]
        %v248 = vld [vmem:[%s191 + $0x70] sm:$0xff]
        %v249 = vld [vmem:[%s191 + $0x78] sm:$0xff]
        %v250 = vld [vmem:[%s191 + $0x80] sm:$0xff]
        %v251 = vld [vmem:[%s191 + $0x88] sm:$0xff]
        %v252 = vld [vmem:[%s191 + $0x90] sm:$0xff]
        %v253 = vld [vmem:[%s191 + $0x98] sm:$0xff]
        %v254 = vld [vmem:[%s191 + $0xa0] sm:$0xff]
        %v255 = vld [vmem:[%s191 + $0xa8] sm:$0xff]
        %v256 = vld [vmem:[%s191 + $0xb0] sm:$0xff]
        %v257 = vld [vmem:[%s191 + $0xb8] sm:$0xff]
        %v258 = vld [vmem:[%s191 + $0xc0] sm:$0xff]
        %v259 = vld [vmem:[%s191 + $0xc8] sm:$0xff]
        %v260 = vld [vmem:[%s191 + $0xd0] sm:$0xff]
        %v261 = vld [vmem:[%s191 + $0xd8] sm:$0xff]
        %v262 = vld [vmem:[%s191 + $0xe0] sm:$0xff]
        %v263 = vld [vmem:[%s191 + $0xe8] sm:$0xff]
        %v264 = vld [vmem:[%s191 + $0xf0] sm:$0xff]
        %v265 = vld [vmem:[%s191 + $0xf8] sm:$0xff]
        %v266 = vld [vmem:[%s191 + $0x100] sm:$0xff]
        %v267 = vld [vmem:[%s191 + $0x108] sm:$0xff]
        %v268 = vld [vmem:[%s191 + $0x110] sm:$0xff]
        %v269 = vld [vmem:[%s191 + $0x118] sm:$0xff]
        %v270 = vld [vmem:[%s191 + $0x120] sm:$0xff]
        %v271 = vld [vmem:[%s191 + $0x128] sm:$0xff]
        %v272 = vld [vmem:[%s191 + $0x130] sm:$0xff]
        %v273 = vld [vmem:[%s191 + $0x138] sm:$0xff]
        %v274 = vld [vmem:[%s191 + $0x140] sm:$0xff]
        %v275 = vld [vmem:[%s191 + $0x148] sm:$0xff]
        %v276 = vld [vmem:[%s191 + $0x150] sm:$0xff]
        %v277 = vld [vmem:[%s191 + $0x158] sm:$0xff]
        %v278 = vld [vmem:[%s191 + $0x160] sm:$0xff]
        %v279 = vld [vmem:[%s191 + $0x168] sm:$0xff]
        %v280 = vld [vmem:[%s191 + $0x170] sm:$0xff]
        %v281 = vld [vmem:[%s191 + $0x178] sm:$0xff]
        %v282 = vld [vmem:[%s191 + $0x180] sm:$0xff]
        %v283 = vld [vmem:[%s191 + $0x188] sm:$0xff]
        %v284 = vld [vmem:[%s191 + $0x190] sm:$0xff]
        %v285 = vld [vmem:[%s191 + $0x198] sm:$0xff]
        %v286 = vld [vmem:[%s191 + $0x1a0] sm:$0xff]
        %v287 = vld [vmem:[%s191 + $0x1a8] sm:$0xff]
        %v288 = vld [vmem:[%s191 + $0x1b0] sm:$0xff]
        %v289 = vld [vmem:[%s191 + $0x1b8] sm:$0xff]
        %v290 = vld [vmem:[%s191 + $0x1c0] sm:$0xff]
        %v291 = vld [vmem:[%s191 + $0x1c8] sm:$0xff]
        %v292 = vld [vmem:[%s191 + $0x1d0] sm:$0xff]
        %v293 = vld [vmem:[%s191 + $0x1d8] sm:$0xff]
        %v294 = vld [vmem:[%s191 + $0x1e0] sm:$0xff]
        %v295 = vld [vmem:[%s191 + $0x1e8] sm:$0xff]
        %v296 = vld [vmem:[%s191 + $0x1f0] sm:$0xff]
        %v297 = vld [vmem:[%s191 + $0x1f8] sm:$0xff]
        %v298 = vld [vmem:[%s191 + $0x200] sm:$0xff]
        %v299 = vld [vmem:[%s191 + $0x208] sm:$0xff]
        %v300 = vld [vmem:[%s191 + $0x210] sm:$0xff]
        %v301 = vld [vmem:[%s191 + $0x218] sm:$0xff]
        %v302 = vld [vmem:[%s191 + $0x220] sm:$0xff]
        %v303 = vld [vmem:[%s191 + $0x228] sm:$0xff]
        %v304 = vld [vmem:[%s191 + $0x230] sm:$0xff]
        %v305 = vld [vmem:[%s191 + $0x238] sm:$0xff]
        %v306 = vld [vmem:[%s191 + $0x240] sm:$0xff]
        %v307 = vld [vmem:[%s191 + $0x248] sm:$0xff]
        %v308 = vld [vmem:[%s191 + $0x250] sm:$0xff]
        %v309 = vld [vmem:[%s191 + $0x258] sm:$0xff]
        %v310 = vld [vmem:[%s191 + $0x260] sm:$0xff]
        %v311 = vld [vmem:[%s191 + $0x268] sm:$0xff]
        %v312 = vld [vmem:[%s191 + $0x270] sm:$0xff]
        %v313 = vld [vmem:[%s191 + $0x278] sm:$0xff]
        %v314 = vld [vmem:[%s191 + $0x280] sm:$0xff]
        %v315 = vld [vmem:[%s191 + $0x288] sm:$0xff]
        %v316 = vld [vmem:[%s191 + $0x290] sm:$0xff]
        %v317 = vld [vmem:[%s191 + $0x298] sm:$0xff]
        %v318 = vld [vmem:[%s191 + $0x2a0] sm:$0xff]
        %v319 = vld [vmem:[%s191 + $0x2a8] sm:$0xff]
        %v320 = vld [vmem:[%s191 + $0x2b0] sm:$0xff]
        %v321 = vld [vmem:[%s191 + $0x2b8] sm:$0xff]
        %v322 = vld [vmem:[%s191 + $0x2c0] sm:$0xff]
        %v323 = vld [vmem:[%s191 + $0x2c8] sm:$0xff]
        %v324 = vld [vmem:[%s191 + $0x2d0] sm:$0xff]
        %v325 = vld [vmem:[%s191 + $0x2d8] sm:$0xff]
        %v326 = vld [vmem:[%s191 + $0x2e0] sm:$0xff]
        %v327 = vld [vmem:[%s191 + $0x2e8] sm:$0xff]
        %v328 = vld [vmem:[%s191 + $0x2f0] sm:$0xff]
        %v329 = vld [vmem:[%s191 + $0x2f8] sm:$0xff]
        %v330 = vld [vmem:[%s191 + $0x300] sm:$0xff]
        %v331 = vld [vmem:[%s191 + $0x308] sm:$0xff]
        %v332 = vld [vmem:[%s191 + $0x310] sm:$0xff]
        %v333 = vld [vmem:[%s191 + $0x318] sm:$0xff]
        %v334 = vld [vmem:[%s191 + $0x320] sm:$0xff]
        %v335 = vld [vmem:[%s191 + $0x328] sm:$0xff]
        %v336 = vld [vmem:[%s191 + $0x330] sm:$0xff]
        %v337 = vld [vmem:[%s191 + $0x338] sm:$0xff]
        %v338 = vld [vmem:[%s191 + $0x340] sm:$0xff]
        %v339 = vld [vmem:[%s191 + $0x348] sm:$0xff]
        %v340 = vld [vmem:[%s191 + $0x350] sm:$0xff]
        %v341 = vld [vmem:[%s191 + $0x358] sm:$0xff]
        %v342 = vld [vmem:[%s191 + $0x360] sm:$0xff]
        %v343 = vld [vmem:[%s191 + $0x368] sm:$0xff]
        %v344 = vld [vmem:[%s191 + $0x370] sm:$0xff]
        %v345 = vld [vmem:[%s191 + $0x378] sm:$0xff]
        %v346 = vld [vmem:[%s191 + $0x380] sm:$0xff]
        %v347 = vld [vmem:[%s191 + $0x388] sm:$0xff]
        %v348 = vld [vmem:[%s191 + $0x390] sm:$0xff]
        %v349 = vld [vmem:[%s191 + $0x398] sm:$0xff]
        %v350 = vld [vmem:[%s191 + $0x3a0] sm:$0xff]
        %v351 = vld [vmem:[%s191 + $0x3a8] sm:$0xff]
        %v352 = vld [vmem:[%s191 + $0x3b0] sm:$0xff]
        %v353 = vld [vmem:[%s191 + $0x3b8] sm:$0xff]
        %v354 = vld [vmem:[%s191 + $0x3c0] sm:$0xff]
        %v355 = vld [vmem:[%s191 + $0x3c8] sm:$0xff]
        %v356 = vld [vmem:[%s191 + $0x3d0] sm:$0xff]
        %v357 = vld [vmem:[%s191 + $0x3d8] sm:$0xff]
        %v358 = vld [vmem:[%s191 + $0x3e0] sm:$0xff]
        %v359 = vld [vmem:[%s191 + $0x3e8] sm:$0xff]
        %v360 = vld [vmem:[%s191 + $0x3f0] sm:$0xff]
        %v361 = vld [vmem:[%s191 + $0x3f8] sm:$0xff]
        %v362 = vld [vmem:[%s191 + $0x400] sm:$0xff]
        %v363 = vld [vmem:[%s191 + $0x408] sm:$0xff]
        %v364 = vld [vmem:[%s191 + $0x410] sm:$0xff]
        %v365 = vld [vmem:[%s191 + $0x418] sm:$0xff]
        %v366 = vld [vmem:[%s191 + $0x420] sm:$0xff]
        %v367 = vld [vmem:[%s191 + $0x428] sm:$0xff]
        %v368 = vld [vmem:[%s191 + $0x430] sm:$0xff]
        %v369 = vld [vmem:[%s191 + $0x438] sm:$0xff]
        %v370 = vld [vmem:[%s191 + $0x440] sm:$0xff]
        %v371 = vld [vmem:[%s191 + $0x448] sm:$0xff]
        %v372 = vld [vmem:[%s191 + $0x450] sm:$0xff]
        %v373 = vld [vmem:[%s191 + $0x458] sm:$0xff]
        %v374 = vld [vmem:[%s191 + $0x460] sm:$0xff]
        %v375 = vld [vmem:[%s191 + $0x468] sm:$0xff]
        %v376 = vld [vmem:[%s191 + $0x470] sm:$0xff]
        %v377 = vld [vmem:[%s191 + $0x478] sm:$0xff]
        %v378 = vld [vmem:[%s191 + $0x480] sm:$0xff]
        %v379 = vld [vmem:[%s191 + $0x488] sm:$0xff]
        %v380 = vld [vmem:[%s191 + $0x490] sm:$0xff]
        %v381 = vld [vmem:[%s191 + $0x498] sm:$0xff]
        %v382 = vld [vmem:[%s191 + $0x4a0] sm:$0xff]
        %v383 = vld [vmem:[%s191 + $0x4a8] sm:$0xff]
        %v384 = vld [vmem:[%s191 + $0x4b0] sm:$0xff]
        %v385 = vld [vmem:[%s191 + $0x4b8] sm:$0xff]
        %v386 = vld [vmem:[%s191 + $0x4c0] sm:$0xff]
        %v387 = vld [vmem:[%s191 + $0x4c8] sm:$0xff]
        %v388 = vld [vmem:[%s191 + $0x4d0] sm:$0xff]
        %v389 = vld [vmem:[%s191 + $0x4d8] sm:$0xff]
        %v390 = vld [vmem:[%s191 + $0x4e0] sm:$0xff]
        %v391 = vld [vmem:[%s191 + $0x4e8] sm:$0xff]
        %v392 = vld [vmem:[%s191 + $0x4f0] sm:$0xff]
        %v393 = vld [vmem:[%s191 + $0x4f8] sm:$0xff]
        %v394 = vld [vmem:[%s191 + $0x500] sm:$0xff]
        %v395 = vld [vmem:[%s191 + $0x508] sm:$0xff]
        %v396 = vld [vmem:[%s191 + $0x510] sm:$0xff]
        %v397 = vld [vmem:[%s191 + $0x518] sm:$0xff]
        %v398 = vld [vmem:[%s191 + $0x520] sm:$0xff]
        %v399 = vld [vmem:[%s191 + $0x528] sm:$0xff]
        %v400 = vld [vmem:[%s191 + $0x530] sm:$0xff]
        %v401 = vld [vmem:[%s191 + $0x538] sm:$0xff]
        %v402 = vld [vmem:[%s191 + $0x540] sm:$0xff]
        %v403 = vld [vmem:[%s191 + $0x548] sm:$0xff]
        %v404 = vld [vmem:[%s191 + $0x550] sm:$0xff]
        %v405 = vld [vmem:[%s191 + $0x558] sm:$0xff]
        %v406 = vld [vmem:[%s191 + $0x560] sm:$0xff]
        %v407 = vld [vmem:[%s191 + $0x568] sm:$0xff]
        %v408 = vld [vmem:[%s191 + $0x570] sm:$0xff]
        %v409 = vld [vmem:[%s191 + $0x578] sm:$0xff]
        %v410 = vld [vmem:[%s191 + $0x580] sm:$0xff]
        %v411 = vld [vmem:[%s191 + $0x588] sm:$0xff]
        %v412 = vld [vmem:[%s191 + $0x590] sm:$0xff]
        %v413 = vld [vmem:[%s191 + $0x598] sm:$0xff]
        %v414 = vld [vmem:[%s191 + $0x5a0] sm:$0xff]
        %v415 = vld [vmem:[%s191 + $0x5a8] sm:$0xff]
        %v416 = vld [vmem:[%s191 + $0x5b0] sm:$0xff]
        %v417 = vld [vmem:[%s191 + $0x5b8] sm:$0xff]
        %v418 = vld [vmem:[%s191 + $0x5c0] sm:$0xff]
        %v419 = vld [vmem:[%s191 + $0x5c8] sm:$0xff]
        %v420 = vld [vmem:[%s191 + $0x5d0] sm:$0xff]
        %v421 = vld [vmem:[%s191 + $0x5d8] sm:$0xff]
        %v422 = vld [vmem:[%s191 + $0x5e0] sm:$0xff]
        %v423 = vld [vmem:[%s191 + $0x5e8] sm:$0xff]
        %v424 = vld [vmem:[%s191 + $0x5f0] sm:$0xff]
        %v425 = vld [vmem:[%s191 + $0x5f8] sm:$0xff]
        %v426 = vld [vmem:[%s191 + $0x600] sm:$0xff]
        %v427 = vld [vmem:[%s191 + $0x608] sm:$0xff]
        %v428 = vld [vmem:[%s191 + $0x610] sm:$0xff]
        %v429 = vld [vmem:[%s191 + $0x618] sm:$0xff]
        %v430 = vld [vmem:[%s191 + $0x620] sm:$0xff]
        %v431 = vld [vmem:[%s191 + $0x628] sm:$0xff]
        %v432 = vld [vmem:[%s191 + $0x630] sm:$0xff]
        %v433 = vld [vmem:[%s191 + $0x638] sm:$0xff]
        %v434 = vld [vmem:[%s191 + $0x640] sm:$0xff]
        %v435 = vld [vmem:[%s191 + $0x648] sm:$0xff]
        %v436 = vld [vmem:[%s191 + $0x650] sm:$0xff]
        %v437 = vld [vmem:[%s191 + $0x658] sm:$0xff]
        %v438 = vld [vmem:[#allocation5] sm:$0xff]
        %v439 = vld [vmem:[#allocation5 + $0x8] sm:$0xf]
        %v442 = vlaneseq
        %v443 = vshrl.u32 %v442, 7
        %v444 = vsub.s32 0, %v443
        %v445 = vrot.slane %v438, %v444
        %v446 = vlaneseq
        %v447 = vshrl.u32 %v446, 7
        %v448 = vsub.s32 1, %v447
        %v449 = vrot.slane %v438, %v448
        %v450 = vlaneseq
        %v451 = vshrl.u32 %v450, 7
        %v452 = vsub.s32 2, %v451
        %v453 = vrot.slane %v438, %v452
        %v454 = vlaneseq
        %v455 = vshrl.u32 %v454, 7
        %v456 = vsub.s32 3, %v455
        %v457 = vrot.slane %v438, %v456
        %v458 = vlaneseq
        %v459 = vshrl.u32 %v458, 7
        %v460 = vsub.s32 4, %v459
        %v461 = vrot.slane %v438, %v460
        %v462 = vlaneseq
        %v463 = vshrl.u32 %v462, 7
        %v464 = vsub.s32 5, %v463
        %v465 = vrot.slane %v438, %v464
        %v466 = vlaneseq
        %v467 = vshrl.u32 %v466, 7
        %v468 = vsub.s32 6, %v467
        %v469 = vrot.slane %v438, %v468
        %v470 = vlaneseq
        %v471 = vshrl.u32 %v470, 7
        %v472 = vsub.s32 7, %v471
        %v473 = vrot.slane %v438, %v472
        %v474 = vlaneseq
        %v475 = vshrl.u32 %v474, 7
        %v476 = vsub.s32 0, %v475
        %v477 = vrot.slane %v439, %v476
        %v478 = vlaneseq
        %v479 = vshrl.u32 %v478, 7
        %v480 = vsub.s32 1, %v479
        %v481 = vrot.slane %v439, %v480
        %v482 = vlaneseq
        %v483 = vshrl.u32 %v482, 7
        %v484 = vsub.s32 2, %v483
        %v485 = vrot.slane %v439, %v484
        %v486 = vlaneseq
        %v487 = vshrl.u32 %v486, 7
        %v488 = vsub.s32 3, %v487
        %v489 = vrot.slane %v439, %v488
        %v502 = vmul.f32 %v234, %v445
        %v503 = vmul.f32 %v235, %v449
        %v504 = vmul.f32 %v236, %v453
        %v505 = vmul.f32 %v237, %v457
        %v506 = vmul.f32 %v238, %v461
        %v507 = vmul.f32 %v239, %v465
        %v508 = vmul.f32 %v240, %v469
        %v509 = vmul.f32 %v241, %v473
        %v510 = vmul.f32 %v242, %v477
        %v511 = vmul.f32 %v243, %v481
        %v512 = vmul.f32 %v244, %v485
        %v513 = vmul.f32 %v245, %v489
        %v514 = vmul.f32 %v246, %v445
        %v515 = vmul.f32 %v247, %v449
        %v516 = vmul.f32 %v248, %v453
        %v517 = vmul.f32 %v249, %v457
        %v518 = vmul.f32 %v250, %v461
        %v519 = vmul.f32 %v251, %v465
        %v520 = vmul.f32 %v252, %v469
        %v521 = vmul.f32 %v253, %v473
        %v522 = vmul.f32 %v254, %v477
        %v523 = vmul.f32 %v255, %v481
        %v524 = vmul.f32 %v256, %v485
        %v525 = vmul.f32 %v257, %v489
        %v526 = vmul.f32 %v258, %v445
        %v527 = vmul.f32 %v259, %v449
        %v528 = vmul.f32 %v260, %v453
        %v529 = vmul.f32 %v261, %v457
        %v530 = vmul.f32 %v262, %v461
        %v531 = vmul.f32 %v263, %v465
        %v532 = vmul.f32 %v264, %v469
        %v533 = vmul.f32 %v265, %v473
        %v534 = vmul.f32 %v266, %v477
        %v535 = vmul.f32 %v267, %v481
        %v536 = vmul.f32 %v268, %v485
        %v537 = vmul.f32 %v269, %v489
        %v538 = vmul.f32 %v270, %v445
        %v539 = vmul.f32 %v271, %v449
        %v540 = vmul.f32 %v272, %v453
        %v541 = vmul.f32 %v273, %v457
        %v542 = vmul.f32 %v274, %v461
        %v543 = vmul.f32 %v275, %v465
        %v544 = vmul.f32 %v276, %v469
        %v545 = vmul.f32 %v277, %v473
        %v546 = vmul.f32 %v278, %v477
        %v547 = vmul.f32 %v279, %v481
        %v548 = vmul.f32 %v280, %v485
        %v549 = vmul.f32 %v281, %v489
        %v550 = vmul.f32 %v282, %v445
        %v551 = vmul.f32 %v283, %v449
        %v552 = vmul.f32 %v284, %v453
        %v553 = vmul.f32 %v285, %v457
        %v554 = vmul.f32 %v286, %v461
        %v555 = vmul.f32 %v287, %v465
        %v556 = vmul.f32 %v288, %v469
        %v557 = vmul.f32 %v289, %v473
        %v558 = vmul.f32 %v290, %v477
        %v559 = vmul.f32 %v291, %v481
        %v560 = vmul.f32 %v292, %v485
        %v561 = vmul.f32 %v293, %v489
        %v562 = vmul.f32 %v294, %v445
        %v563 = vmul.f32 %v295, %v449
        %v564 = vmul.f32 %v296, %v453
        %v565 = vmul.f32 %v297, %v457
        %v566 = vmul.f32 %v298, %v461
        %v567 = vmul.f32 %v299, %v465
        %v568 = vmul.f32 %v300, %v469
        %v569 = vmul.f32 %v301, %v473
        %v570 = vmul.f32 %v302, %v477
        %v571 = vmul.f32 %v303, %v481
        %v572 = vmul.f32 %v304, %v485
        %v573 = vmul.f32 %v305, %v489
        %v574 = vmul.f32 %v306, %v445
        %v575 = vmul.f32 %v307, %v449
        %v576 = vmul.f32 %v308, %v453
        %v577 = vmul.f32 %v309, %v457
        %v578 = vmul.f32 %v310, %v461
        %v579 = vmul.f32 %v311, %v465
        %v580 = vmul.f32 %v312, %v469
        %v581 = vmul.f32 %v313, %v473
        %v582 = vmul.f32 %v314, %v477
        %v583 = vmul.f32 %v315, %v481
        %v584 = vmul.f32 %v316, %v485
        %v585 = vmul.f32 %v317, %v489
        %v586 = vmul.f32 %v318, %v445
        %v587 = vmul.f32 %v319, %v449
        %v588 = vmul.f32 %v320, %v453
        %v589 = vmul.f32 %v321, %v457
        %v590 = vmul.f32 %v322, %v461
        %v591 = vmul.f32 %v323, %v465
        %v592 = vmul.f32 %v324, %v469
        %v593 = vmul.f32 %v325, %v473
        %v594 = vmul.f32 %v326, %v477
        %v595 = vmul.f32 %v327, %v481
        %v596 = vmul.f32 %v328, %v485
        %v597 = vmul.f32 %v329, %v489
        %v598 = vmul.f32 %v330, %v445
        %v599 = vmul.f32 %v331, %v449
        %v600 = vmul.f32 %v332, %v453
        %v601 = vmul.f32 %v333, %v457
        %v602 = vmul.f32 %v334, %v461
        %v603 = vmul.f32 %v335, %v465
        %v604 = vmul.f32 %v336, %v469
        %v605 = vmul.f32 %v337, %v473
        %v606 = vmul.f32 %v338, %v477
        %v607 = vmul.f32 %v339, %v481
        %v608 = vmul.f32 %v340, %v485
        %v609 = vmul.f32 %v341, %v489
        %v610 = vmul.f32 %v342, %v445
        %v611 = vmul.f32 %v343, %v449
        %v612 = vmul.f32 %v344, %v453
        %v613 = vmul.f32 %v345, %v457
        %v614 = vmul.f32 %v346, %v461
        %v615 = vmul.f32 %v347, %v465
        %v616 = vmul.f32 %v348, %v469
        %v617 = vmul.f32 %v349, %v473
        %v618 = vmul.f32 %v350, %v477
        %v619 = vmul.f32 %v351, %v481
        %v620 = vmul.f32 %v352, %v485
        %v621 = vmul.f32 %v353, %v489
        %v622 = vmul.f32 %v354, %v445
        %v623 = vmul.f32 %v355, %v449
        %v624 = vmul.f32 %v356, %v453
        %v625 = vmul.f32 %v357, %v457
        %v626 = vmul.f32 %v358, %v461
        %v627 = vmul.f32 %v359, %v465
        %v628 = vmul.f32 %v360, %v469
        %v629 = vmul.f32 %v361, %v473
        %v630 = vmul.f32 %v362, %v477
        %v631 = vmul.f32 %v363, %v481
        %v632 = vmul.f32 %v364, %v485
        %v633 = vmul.f32 %v365, %v489
        %v634 = vmul.f32 %v366, %v445
        %v635 = vmul.f32 %v367, %v449
        %v636 = vmul.f32 %v368, %v453
        %v637 = vmul.f32 %v369, %v457
        %v638 = vmul.f32 %v370, %v461
        %v639 = vmul.f32 %v371, %v465
        %v640 = vmul.f32 %v372, %v469
        %v641 = vmul.f32 %v373, %v473
        %v642 = vmul.f32 %v374, %v477
        %v643 = vmul.f32 %v375, %v481
        %v644 = vmul.f32 %v376, %v485
        %v645 = vmul.f32 %v377, %v489
        %v646 = vmul.f32 %v378, %v445
        %v647 = vmul.f32 %v379, %v449
        %v648 = vmul.f32 %v380, %v453
        %v649 = vmul.f32 %v381, %v457
        %v650 = vmul.f32 %v382, %v461
        %v651 = vmul.f32 %v383, %v465
        %v652 = vmul.f32 %v384, %v469
        %v653 = vmul.f32 %v385, %v473
        %v654 = vmul.f32 %v386, %v477
        %v655 = vmul.f32 %v387, %v481
        %v656 = vmul.f32 %v388, %v485
        %v657 = vmul.f32 %v389, %v489
        %v658 = vmul.f32 %v390, %v445
        %v659 = vmul.f32 %v391, %v449
        %v660 = vmul.f32 %v392, %v453
        %v661 = vmul.f32 %v393, %v457
        %v662 = vmul.f32 %v394, %v461
        %v663 = vmul.f32 %v395, %v465
        %v664 = vmul.f32 %v396, %v469
        %v665 = vmul.f32 %v397, %v473
        %v666 = vmul.f32 %v398, %v477
        %v667 = vmul.f32 %v399, %v481
        %v668 = vmul.f32 %v400, %v485
        %v669 = vmul.f32 %v401, %v489
        %v670 = vmul.f32 %v402, %v445
        %v671 = vmul.f32 %v403, %v449
        %v672 = vmul.f32 %v404, %v453
        %v673 = vmul.f32 %v405, %v457
        %v674 = vmul.f32 %v406, %v461
        %v675 = vmul.f32 %v407, %v465
        %v676 = vmul.f32 %v408, %v469
        %v677 = vmul.f32 %v409, %v473
        %v678 = vmul.f32 %v410, %v477
        %v679 = vmul.f32 %v411, %v481
        %v680 = vmul.f32 %v412, %v485
        %v681 = vmul.f32 %v413, %v489
        %v682 = vmul.f32 %v414, %v445
        %v683 = vmul.f32 %v415, %v449
        %v684 = vmul.f32 %v416, %v453
        %v685 = vmul.f32 %v417, %v457
        %v686 = vmul.f32 %v418, %v461
        %v687 = vmul.f32 %v419, %v465
        %v688 = vmul.f32 %v420, %v469
        %v689 = vmul.f32 %v421, %v473
        %v690 = vmul.f32 %v422, %v477
        %v691 = vmul.f32 %v423, %v481
        %v692 = vmul.f32 %v424, %v485
        %v693 = vmul.f32 %v425, %v489
        %v694 = vmul.f32 %v426, %v445
        %v695 = vmul.f32 %v427, %v449
        %v696 = vmul.f32 %v428, %v453
        %v697 = vmul.f32 %v429, %v457
        %v698 = vmul.f32 %v430, %v461
        %v699 = vmul.f32 %v431, %v465
        %v700 = vmul.f32 %v432, %v469
        %v701 = vmul.f32 %v433, %v473
        %v702 = vmul.f32 %v434, %v477
        %v703 = vmul.f32 %v435, %v481
        %v704 = vmul.f32 %v436, %v485
        %v705 = vmul.f32 %v437, %v489
        %v706 = vld [vmem:[#allocation7] sm:$0xff]
        %v707 = vld [vmem:[#allocation7 + $0x8] sm:$0xf]
        %v710 = vlaneseq
        %v711 = vshrl.u32 %v710, 7
        %v712 = vsub.s32 0, %v711
        %v713 = vrot.slane %v706, %v712
        %v714 = vlaneseq
        %v715 = vshrl.u32 %v714, 7
        %v716 = vsub.s32 1, %v715
        %v717 = vrot.slane %v706, %v716
        %v718 = vlaneseq
        %v719 = vshrl.u32 %v718, 7
        %v720 = vsub.s32 2, %v719
        %v721 = vrot.slane %v706, %v720
        %v722 = vlaneseq
        %v723 = vshrl.u32 %v722, 7
        %v724 = vsub.s32 3, %v723
        %v725 = vrot.slane %v706, %v724
        %v726 = vlaneseq
        %v727 = vshrl.u32 %v726, 7
        %v728 = vsub.s32 4, %v727
        %v729 = vrot.slane %v706, %v728
        %v730 = vlaneseq
        %v731 = vshrl.u32 %v730, 7
        %v732 = vsub.s32 5, %v731
        %v733 = vrot.slane %v706, %v732
        %v734 = vlaneseq
        %v735 = vshrl.u32 %v734, 7
        %v736 = vsub.s32 6, %v735
        %v737 = vrot.slane %v706, %v736
        %v738 = vlaneseq
        %v739 = vshrl.u32 %v738, 7
        %v740 = vsub.s32 7, %v739
        %v741 = vrot.slane %v706, %v740
        %v742 = vlaneseq
        %v743 = vshrl.u32 %v742, 7
        %v744 = vsub.s32 0, %v743
        %v745 = vrot.slane %v707, %v744
        %v746 = vlaneseq
        %v747 = vshrl.u32 %v746, 7
        %v748 = vsub.s32 1, %v747
        %v749 = vrot.slane %v707, %v748
        %v750 = vlaneseq
        %v751 = vshrl.u32 %v750, 7
        %v752 = vsub.s32 2, %v751
        %v753 = vrot.slane %v707, %v752
        %v754 = vlaneseq
        %v755 = vshrl.u32 %v754, 7
        %v756 = vsub.s32 3, %v755
        %v757 = vrot.slane %v707, %v756
        %v770 = vadd.f32 %v502, %v713
        %v771 = vadd.f32 %v503, %v717
        %v772 = vadd.f32 %v504, %v721
        %v773 = vadd.f32 %v505, %v725
        %v774 = vadd.f32 %v506, %v729
        %v775 = vadd.f32 %v507, %v733
        %v776 = vadd.f32 %v508, %v737
        %v777 = vadd.f32 %v509, %v741
        %v778 = vadd.f32 %v510, %v745
        %v779 = vadd.f32 %v511, %v749
        %v780 = vadd.f32 %v512, %v753
        %v781 = vadd.f32 %v513, %v757
        %v782 = vadd.f32 %v514, %v713
        %v783 = vadd.f32 %v515, %v717
        %v784 = vadd.f32 %v516, %v721
        %v785 = vadd.f32 %v517, %v725
        %v786 = vadd.f32 %v518, %v729
        %v787 = vadd.f32 %v519, %v733
        %v788 = vadd.f32 %v520, %v737
        %v789 = vadd.f32 %v521, %v741
        %v790 = vadd.f32 %v522, %v745
        %v791 = vadd.f32 %v523, %v749
        %v792 = vadd.f32 %v524, %v753
        %v793 = vadd.f32 %v525, %v757
        %v794 = vadd.f32 %v526, %v713
        %v795 = vadd.f32 %v527, %v717
        %v796 = vadd.f32 %v528, %v721
        %v797 = vadd.f32 %v529, %v725
        %v798 = vadd.f32 %v530, %v729
        %v799 = vadd.f32 %v531, %v733
        %v800 = vadd.f32 %v532, %v737
        %v801 = vadd.f32 %v533, %v741
        %v802 = vadd.f32 %v534, %v745
        %v803 = vadd.f32 %v535, %v749
        %v804 = vadd.f32 %v536, %v753
        %v805 = vadd.f32 %v537, %v757
        %v806 = vadd.f32 %v538, %v713
        %v807 = vadd.f32 %v539, %v717
        %v808 = vadd.f32 %v540, %v721
        %v809 = vadd.f32 %v541, %v725
        %v810 = vadd.f32 %v542, %v729
        %v811 = vadd.f32 %v543, %v733
        %v812 = vadd.f32 %v544, %v737
        %v813 = vadd.f32 %v545, %v741
        %v814 = vadd.f32 %v546, %v745
        %v815 = vadd.f32 %v547, %v749
        %v816 = vadd.f32 %v548, %v753
        %v817 = vadd.f32 %v549, %v757
        %v818 = vadd.f32 %v550, %v713
        %v819 = vadd.f32 %v551, %v717
        %v820 = vadd.f32 %v552, %v721
        %v821 = vadd.f32 %v553, %v725
        %v822 = vadd.f32 %v554, %v729
        %v823 = vadd.f32 %v555, %v733
        %v824 = vadd.f32 %v556, %v737
        %v825 = vadd.f32 %v557, %v741
        %v826 = vadd.f32 %v558, %v745
        %v827 = vadd.f32 %v559, %v749
        %v828 = vadd.f32 %v560, %v753
        %v829 = vadd.f32 %v561, %v757
        %v830 = vadd.f32 %v562, %v713
        %v831 = vadd.f32 %v563, %v717
        %v832 = vadd.f32 %v564, %v721
        %v833 = vadd.f32 %v565, %v725
        %v834 = vadd.f32 %v566, %v729
        %v835 = vadd.f32 %v567, %v733
        %v836 = vadd.f32 %v568, %v737
        %v837 = vadd.f32 %v569, %v741
        %v838 = vadd.f32 %v570, %v745
        %v839 = vadd.f32 %v571, %v749
        %v840 = vadd.f32 %v572, %v753
        %v841 = vadd.f32 %v573, %v757
        %v842 = vadd.f32 %v574, %v713
        %v843 = vadd.f32 %v575, %v717
        %v844 = vadd.f32 %v576, %v721
        %v845 = vadd.f32 %v577, %v725
        %v846 = vadd.f32 %v578, %v729
        %v847 = vadd.f32 %v579, %v733
        %v848 = vadd.f32 %v580, %v737
        %v849 = vadd.f32 %v581, %v741
        %v850 = vadd.f32 %v582, %v745
        %v851 = vadd.f32 %v583, %v749
        %v852 = vadd.f32 %v584, %v753
        %v853 = vadd.f32 %v585, %v757
        %v854 = vadd.f32 %v586, %v713
        %v855 = vadd.f32 %v587, %v717
        %v856 = vadd.f32 %v588, %v721
        %v857 = vadd.f32 %v589, %v725
        %v858 = vadd.f32 %v590, %v729
        %v859 = vadd.f32 %v591, %v733
        %v860 = vadd.f32 %v592, %v737
        %v861 = vadd.f32 %v593, %v741
        %v862 = vadd.f32 %v594, %v745
        %v863 = vadd.f32 %v595, %v749
        %v864 = vadd.f32 %v596, %v753
        %v865 = vadd.f32 %v597, %v757
        %v866 = vadd.f32 %v598, %v713
        %v867 = vadd.f32 %v599, %v717
        %v868 = vadd.f32 %v600, %v721
        %v869 = vadd.f32 %v601, %v725
        %v870 = vadd.f32 %v602, %v729
        %v871 = vadd.f32 %v603, %v733
        %v872 = vadd.f32 %v604, %v737
        %v873 = vadd.f32 %v605, %v741
        %v874 = vadd.f32 %v606, %v745
        %v875 = vadd.f32 %v607, %v749
        %v876 = vadd.f32 %v608, %v753
        %v877 = vadd.f32 %v609, %v757
        %v878 = vadd.f32 %v610, %v713
        %v879 = vadd.f32 %v611, %v717
        %v880 = vadd.f32 %v612, %v721
        %v881 = vadd.f32 %v613, %v725
        %v882 = vadd.f32 %v614, %v729
        %v883 = vadd.f32 %v615, %v733
        %v884 = vadd.f32 %v616, %v737
        %v885 = vadd.f32 %v617, %v741
        %v886 = vadd.f32 %v618, %v745
        %v887 = vadd.f32 %v619, %v749
        %v888 = vadd.f32 %v620, %v753
        %v889 = vadd.f32 %v621, %v757
        %v890 = vadd.f32 %v622, %v713
        %v891 = vadd.f32 %v623, %v717
        %v892 = vadd.f32 %v624, %v721
        %v893 = vadd.f32 %v625, %v725
        %v894 = vadd.f32 %v626, %v729
        %v895 = vadd.f32 %v627, %v733
        %v896 = vadd.f32 %v628, %v737
        %v897 = vadd.f32 %v629, %v741
        %v898 = vadd.f32 %v630, %v745
        %v899 = vadd.f32 %v631, %v749
        %v900 = vadd.f32 %v632, %v753
        %v901 = vadd.f32 %v633, %v757
        %v902 = vadd.f32 %v634, %v713
        %v903 = vadd.f32 %v635, %v717
        %v904 = vadd.f32 %v636, %v721
        %v905 = vadd.f32 %v637, %v725
        %v906 = vadd.f32 %v638, %v729
        %v907 = vadd.f32 %v639, %v733
        %v908 = vadd.f32 %v640, %v737
        %v909 = vadd.f32 %v641, %v741
        %v910 = vadd.f32 %v642, %v745
        %v911 = vadd.f32 %v643, %v749
        %v912 = vadd.f32 %v644, %v753
        %v913 = vadd.f32 %v645, %v757
        %v914 = vadd.f32 %v646, %v713
        %v915 = vadd.f32 %v647, %v717
        %v916 = vadd.f32 %v648, %v721
        %v917 = vadd.f32 %v649, %v725
        %v918 = vadd.f32 %v650, %v729
        %v919 = vadd.f32 %v651, %v733
        %v920 = vadd.f32 %v652, %v737
        %v921 = vadd.f32 %v653, %v741
        %v922 = vadd.f32 %v654, %v745
        %v923 = vadd.f32 %v655, %v749
        %v924 = vadd.f32 %v656, %v753
        %v925 = vadd.f32 %v657, %v757
        %v926 = vadd.f32 %v658, %v713
        %v927 = vadd.f32 %v659, %v717
        %v928 = vadd.f32 %v660, %v721
        %v929 = vadd.f32 %v661, %v725
        %v930 = vadd.f32 %v662, %v729
        %v931 = vadd.f32 %v663, %v733
        %v932 = vadd.f32 %v664, %v737
        %v933 = vadd.f32 %v665, %v741
        %v934 = vadd.f32 %v666, %v745
        %v935 = vadd.f32 %v667, %v749
        %v936 = vadd.f32 %v668, %v753
        %v937 = vadd.f32 %v669, %v757
        %v938 = vadd.f32 %v670, %v713
        %v939 = vadd.f32 %v671, %v717
        %v940 = vadd.f32 %v672, %v721
        %v941 = vadd.f32 %v673, %v725
        %v942 = vadd.f32 %v674, %v729
        %v943 = vadd.f32 %v675, %v733
        %v944 = vadd.f32 %v676, %v737
        %v945 = vadd.f32 %v677, %v741
        %v946 = vadd.f32 %v678, %v745
        %v947 = vadd.f32 %v679, %v749
        %v948 = vadd.f32 %v680, %v753
        %v949 = vadd.f32 %v681, %v757
        %v950 = vadd.f32 %v682, %v713
        %v951 = vadd.f32 %v683, %v717
        %v952 = vadd.f32 %v684, %v721
        %v953 = vadd.f32 %v685, %v725
        %v954 = vadd.f32 %v686, %v729
        %v955 = vadd.f32 %v687, %v733
        %v956 = vadd.f32 %v688, %v737
        %v957 = vadd.f32 %v689, %v741
        %v958 = vadd.f32 %v690, %v745
        %v959 = vadd.f32 %v691, %v749
        %v960 = vadd.f32 %v692, %v753
        %v961 = vadd.f32 %v693, %v757
        %v962 = vadd.f32 %v694, %v713
        %v963 = vadd.f32 %v695, %v717
        %v964 = vadd.f32 %v696, %v721
        %v965 = vadd.f32 %v697, %v725
        %v966 = vadd.f32 %v698, %v729
        %v967 = vadd.f32 %v699, %v733
        %v968 = vadd.f32 %v700, %v737
        %v969 = vadd.f32 %v701, %v741
        %v970 = vadd.f32 %v702, %v745
        %v971 = vadd.f32 %v703, %v749
        %v972 = vadd.f32 %v704, %v753
        %v973 = vadd.f32 %v705, %v757
        %974 = vst [vmem:[%s221] sm:$0xff] %v770
        %975 = vst [vmem:[%s221 + $0x8] sm:$0xff] %v771
        %976 = vst [vmem:[%s221 + $0x10] sm:$0xff] %v772
        %977 = vst [vmem:[%s221 + $0x18] sm:$0xff] %v773
        %978 = vst [vmem:[%s221 + $0x20] sm:$0xff] %v774
        %979 = vst [vmem:[%s221 + $0x28] sm:$0xff] %v775
        %980 = vst [vmem:[%s221 + $0x30] sm:$0xff] %v776
        %981 = vst [vmem:[%s221 + $0x38] sm:$0xff] %v777
        %982 = vst [vmem:[%s221 + $0x40] sm:$0xff] %v778
        %983 = vst [vmem:[%s221 + $0x48] sm:$0xff] %v779
        %984 = vst [vmem:[%s221 + $0x50] sm:$0xff] %v780
        %985 = vst [vmem:[%s221 + $0x58] sm:$0xff] %v781
        %986 = vst [vmem:[%s221 + $0x60] sm:$0xff] %v782
        %987 = vst [vmem:[%s221 + $0x68] sm:$0xff] %v783
        %988 = vst [vmem:[%s221 + $0x70] sm:$0xff] %v784
        %989 = vst [vmem:[%s221 + $0x78] sm:$0xff] %v785
        %990 = vst [vmem:[%s221 + $0x80] sm:$0xff] %v786
        %991 = vst [vmem:[%s221 + $0x88] sm:$0xff] %v787
        %992 = vst [vmem:[%s221 + $0x90] sm:$0xff] %v788
        %993 = vst [vmem:[%s221 + $0x98] sm:$0xff] %v789
        %994 = vst [vmem:[%s221 + $0xa0] sm:$0xff] %v790
        %995 = vst [vmem:[%s221 + $0xa8] sm:$0xff] %v791
        %996 = vst [vmem:[%s221 + $0xb0] sm:$0xff] %v792
        %997 = vst [vmem:[%s221 + $0xb8] sm:$0xff] %v793
        %998 = vst [vmem:[%s221 + $0xc0] sm:$0xff] %v794
        %999 = vst [vmem:[%s221 + $0xc8] sm:$0xff] %v795
        %1000 = vst [vmem:[%s221 + $0xd0] sm:$0xff] %v796
        %1001 = vst [vmem:[%s221 + $0xd8] sm:$0xff] %v797
        %1002 = vst [vmem:[%s221 + $0xe0] sm:$0xff] %v798
        %1003 = vst [vmem:[%s221 + $0xe8] sm:$0xff] %v799
        %1004 = vst [vmem:[%s221 + $0xf0] sm:$0xff] %v800
        %1005 = vst [vmem:[%s221 + $0xf8] sm:$0xff] %v801
        %1006 = vst [vmem:[%s221 + $0x100] sm:$0xff] %v802
        %1007 = vst [vmem:[%s221 + $0x108] sm:$0xff] %v803
        %1008 = vst [vmem:[%s221 + $0x110] sm:$0xff] %v804
        %1009 = vst [vmem:[%s221 + $0x118] sm:$0xff] %v805
        %1010 = vst [vmem:[%s221 + $0x120] sm:$0xff] %v806
        %1011 = vst [vmem:[%s221 + $0x128] sm:$0xff] %v807
        %1012 = vst [vmem:[%s221 + $0x130] sm:$0xff] %v808
        %1013 = vst [vmem:[%s221 + $0x138] sm:$0xff] %v809
        %1014 = vst [vmem:[%s221 + $0x140] sm:$0xff] %v810
        %1015 = vst [vmem:[%s221 + $0x148] sm:$0xff] %v811
        %1016 = vst [vmem:[%s221 + $0x150] sm:$0xff] %v812
        %1017 = vst [vmem:[%s221 + $0x158] sm:$0xff] %v813
        %1018 = vst [vmem:[%s221 + $0x160] sm:$0xff] %v814
        %1019 = vst [vmem:[%s221 + $0x168] sm:$0xff] %v815
        %1020 = vst [vmem:[%s221 + $0x170] sm:$0xff] %v816
        %1021 = vst [vmem:[%s221 + $0x178] sm:$0xff] %v817
        %1022 = vst [vmem:[%s221 + $0x180] sm:$0xff] %v818
        %1023 = vst [vmem:[%s221 + $0x188] sm:$0xff] %v819
        %1024 = vst [vmem:[%s221 + $0x190] sm:$0xff] %v820
        %1025 = vst [vmem:[%s221 + $0x198] sm:$0xff] %v821
        %1026 = vst [vmem:[%s221 + $0x1a0] sm:$0xff] %v822
        %1027 = vst [vmem:[%s221 + $0x1a8] sm:$0xff] %v823
        %1028 = vst [vmem:[%s221 + $0x1b0] sm:$0xff] %v824
        %1029 = vst [vmem:[%s221 + $0x1b8] sm:$0xff] %v825
        %1030 = vst [vmem:[%s221 + $0x1c0] sm:$0xff] %v826
        %1031 = vst [vmem:[%s221 + $0x1c8] sm:$0xff] %v827
        %1032 = vst [vmem:[%s221 + $0x1d0] sm:$0xff] %v828
        %1033 = vst [vmem:[%s221 + $0x1d8] sm:$0xff] %v829
        %1034 = vst [vmem:[%s221 + $0x1e0] sm:$0xff] %v830
        %1035 = vst [vmem:[%s221 + $0x1e8] sm:$0xff] %v831
        %1036 = vst [vmem:[%s221 + $0x1f0] sm:$0xff] %v832
        %1037 = vst [vmem:[%s221 + $0x1f8] sm:$0xff] %v833
        %1038 = vst [vmem:[%s221 + $0x200] sm:$0xff] %v834
        %1039 = vst [vmem:[%s221 + $0x208] sm:$0xff] %v835
        %1040 = vst [vmem:[%s221 + $0x210] sm:$0xff] %v836
        %1041 = vst [vmem:[%s221 + $0x218] sm:$0xff] %v837
        %1042 = vst [vmem:[%s221 + $0x220] sm:$0xff] %v838
        %1043 = vst [vmem:[%s221 + $0x228] sm:$0xff] %v839
        %1044 = vst [vmem:[%s221 + $0x230] sm:$0xff] %v840
        %1045 = vst [vmem:[%s221 + $0x238] sm:$0xff] %v841
        %1046 = vst [vmem:[%s221 + $0x240] sm:$0xff] %v842
        %1047 = vst [vmem:[%s221 + $0x248] sm:$0xff] %v843
        %1048 = vst [vmem:[%s221 + $0x250] sm:$0xff] %v844
        %1049 = vst [vmem:[%s221 + $0x258] sm:$0xff] %v845
        %1050 = vst [vmem:[%s221 + $0x260] sm:$0xff] %v846
        %1051 = vst [vmem:[%s221 + $0x268] sm:$0xff] %v847
        %1052 = vst [vmem:[%s221 + $0x270] sm:$0xff] %v848
        %1053 = vst [vmem:[%s221 + $0x278] sm:$0xff] %v849
        %1054 = vst [vmem:[%s221 + $0x280] sm:$0xff] %v850
        %1055 = vst [vmem:[%s221 + $0x288] sm:$0xff] %v851
        %1056 = vst [vmem:[%s221 + $0x290] sm:$0xff] %v852
        %1057 = vst [vmem:[%s221 + $0x298] sm:$0xff] %v853
        %1058 = vst [vmem:[%s221 + $0x2a0] sm:$0xff] %v854
        %1059 = vst [vmem:[%s221 + $0x2a8] sm:$0xff] %v855
        %1060 = vst [vmem:[%s221 + $0x2b0] sm:$0xff] %v856
        %1061 = vst [vmem:[%s221 + $0x2b8] sm:$0xff] %v857
        %1062 = vst [vmem:[%s221 + $0x2c0] sm:$0xff] %v858
        %1063 = vst [vmem:[%s221 + $0x2c8] sm:$0xff] %v859
        %1064 = vst [vmem:[%s221 + $0x2d0] sm:$0xff] %v860
        %1065 = vst [vmem:[%s221 + $0x2d8] sm:$0xff] %v861
        %1066 = vst [vmem:[%s221 + $0x2e0] sm:$0xff] %v862
        %1067 = vst [vmem:[%s221 + $0x2e8] sm:$0xff] %v863
        %1068 = vst [vmem:[%s221 + $0x2f0] sm:$0xff] %v864
        %1069 = vst [vmem:[%s221 + $0x2f8] sm:$0xff] %v865
        %1070 = vst [vmem:[%s221 + $0x300] sm:$0xff] %v866
        %1071 = vst [vmem:[%s221 + $0x308] sm:$0xff] %v867
        %1072 = vst [vmem:[%s221 + $0x310] sm:$0xff] %v868
        %1073 = vst [vmem:[%s221 + $0x318] sm:$0xff] %v869
        %1074 = vst [vmem:[%s221 + $0x320] sm:$0xff] %v870
        %1075 = vst [vmem:[%s221 + $0x328] sm:$0xff] %v871
        %1076 = vst [vmem:[%s221 + $0x330] sm:$0xff] %v872
        %1077 = vst [vmem:[%s221 + $0x338] sm:$0xff] %v873
        %1078 = vst [vmem:[%s221 + $0x340] sm:$0xff] %v874
        %1079 = vst [vmem:[%s221 + $0x348] sm:$0xff] %v875
        %1080 = vst [vmem:[%s221 + $0x350] sm:$0xff] %v876
        %1081 = vst [vmem:[%s221 + $0x358] sm:$0xff] %v877
        %1082 = vst [vmem:[%s221 + $0x360] sm:$0xff] %v878
        %1083 = vst [vmem:[%s221 + $0x368] sm:$0xff] %v879
        %1084 = vst [vmem:[%s221 + $0x370] sm:$0xff] %v880
        %1085 = vst [vmem:[%s221 + $0x378] sm:$0xff] %v881
        %1086 = vst [vmem:[%s221 + $0x380] sm:$0xff] %v882
        %1087 = vst [vmem:[%s221 + $0x388] sm:$0xff] %v883
        %1088 = vst [vmem:[%s221 + $0x390] sm:$0xff] %v884
        %1089 = vst [vmem:[%s221 + $0x398] sm:$0xff] %v885
        %1090 = vst [vmem:[%s221 + $0x3a0] sm:$0xff] %v886
        %1091 = vst [vmem:[%s221 + $0x3a8] sm:$0xff] %v887
        %1092 = vst [vmem:[%s221 + $0x3b0] sm:$0xff] %v888
        %1093 = vst [vmem:[%s221 + $0x3b8] sm:$0xff] %v889
        %1094 = vst [vmem:[%s221 + $0x3c0] sm:$0xff] %v890
        %1095 = vst [vmem:[%s221 + $0x3c8] sm:$0xff] %v891
        %1096 = vst [vmem:[%s221 + $0x3d0] sm:$0xff] %v892
        %1097 = vst [vmem:[%s221 + $0x3d8] sm:$0xff] %v893
        %1098 = vst [vmem:[%s221 + $0x3e0] sm:$0xff] %v894
        %1099 = vst [vmem:[%s221 + $0x3e8] sm:$0xff] %v895
        %1100 = vst [vmem:[%s221 + $0x3f0] sm:$0xff] %v896
        %1101 = vst [vmem:[%s221 + $0x3f8] sm:$0xff] %v897
        %1102 = vst [vmem:[%s221 + $0x400] sm:$0xff] %v898
        %1103 = vst [vmem:[%s221 + $0x408] sm:$0xff] %v899
        %1104 = vst [vmem:[%s221 + $0x410] sm:$0xff] %v900
        %1105 = vst [vmem:[%s221 + $0x418] sm:$0xff] %v901
        %1106 = vst [vmem:[%s221 + $0x420] sm:$0xff] %v902
        %1107 = vst [vmem:[%s221 + $0x428] sm:$0xff] %v903
        %1108 = vst [vmem:[%s221 + $0x430] sm:$0xff] %v904
        %1109 = vst [vmem:[%s221 + $0x438] sm:$0xff] %v905
        %1110 = vst [vmem:[%s221 + $0x440] sm:$0xff] %v906
        %1111 = vst [vmem:[%s221 + $0x448] sm:$0xff] %v907
        %1112 = vst [vmem:[%s221 + $0x450] sm:$0xff] %v908
        %1113 = vst [vmem:[%s221 + $0x458] sm:$0xff] %v909
        %1114 = vst [vmem:[%s221 + $0x460] sm:$0xff] %v910
        %1115 = vst [vmem:[%s221 + $0x468] sm:$0xff] %v911
        %1116 = vst [vmem:[%s221 + $0x470] sm:$0xff] %v912
        %1117 = vst [vmem:[%s221 + $0x478] sm:$0xff] %v913
        %1118 = vst [vmem:[%s221 + $0x480] sm:$0xff] %v914
        %1119 = vst [vmem:[%s221 + $0x488] sm:$0xff] %v915
        %1120 = vst [vmem:[%s221 + $0x490] sm:$0xff] %v916
        %1121 = vst [vmem:[%s221 + $0x498] sm:$0xff] %v917
        %1122 = vst [vmem:[%s221 + $0x4a0] sm:$0xff] %v918
        %1123 = vst [vmem:[%s221 + $0x4a8] sm:$0xff] %v919
        %1124 = vst [vmem:[%s221 + $0x4b0] sm:$0xff] %v920
        %1125 = vst [vmem:[%s221 + $0x4b8] sm:$0xff] %v921
        %1126 = vst [vmem:[%s221 + $0x4c0] sm:$0xff] %v922
        %1127 = vst [vmem:[%s221 + $0x4c8] sm:$0xff] %v923
        %1128 = vst [vmem:[%s221 + $0x4d0] sm:$0xff] %v924
        %1129 = vst [vmem:[%s221 + $0x4d8] sm:$0xff] %v925
        %1130 = vst [vmem:[%s221 + $0x4e0] sm:$0xff] %v926
        %1131 = vst [vmem:[%s221 + $0x4e8] sm:$0xff] %v927
        %1132 = vst [vmem:[%s221 + $0x4f0] sm:$0xff] %v928
        %1133 = vst [vmem:[%s221 + $0x4f8] sm:$0xff] %v929
        %1134 = vst [vmem:[%s221 + $0x500] sm:$0xff] %v930
        %1135 = vst [vmem:[%s221 + $0x508] sm:$0xff] %v931
        %1136 = vst [vmem:[%s221 + $0x510] sm:$0xff] %v932
        %1137 = vst [vmem:[%s221 + $0x518] sm:$0xff] %v933
        %1138 = vst [vmem:[%s221 + $0x520] sm:$0xff] %v934
        %1139 = vst [vmem:[%s221 + $0x528] sm:$0xff] %v935
        %1140 = vst [vmem:[%s221 + $0x530] sm:$0xff] %v936
        %1141 = vst [vmem:[%s221 + $0x538] sm:$0xff] %v937
        %1142 = vst [vmem:[%s221 + $0x540] sm:$0xff] %v938
        %1143 = vst [vmem:[%s221 + $0x548] sm:$0xff] %v939
        %1144 = vst [vmem:[%s221 + $0x550] sm:$0xff] %v940
        %1145 = vst [vmem:[%s221 + $0x558] sm:$0xff] %v941
        %1146 = vst [vmem:[%s221 + $0x560] sm:$0xff] %v942
        %1147 = vst [vmem:[%s221 + $0x568] sm:$0xff] %v943
        %1148 = vst [vmem:[%s221 + $0x570] sm:$0xff] %v944
        %1149 = vst [vmem:[%s221 + $0x578] sm:$0xff] %v945
        %1150 = vst [vmem:[%s221 + $0x580] sm:$0xff] %v946
        %1151 = vst [vmem:[%s221 + $0x588] sm:$0xff] %v947
        %1152 = vst [vmem:[%s221 + $0x590] sm:$0xff] %v948
        %1153 = vst [vmem:[%s221 + $0x598] sm:$0xff] %v949
        %1154 = vst [vmem:[%s221 + $0x5a0] sm:$0xff] %v950
        %1155 = vst [vmem:[%s221 + $0x5a8] sm:$0xff] %v951
        %1156 = vst [vmem:[%s221 + $0x5b0] sm:$0xff] %v952
        %1157 = vst [vmem:[%s221 + $0x5b8] sm:$0xff] %v953
        %1158 = vst [vmem:[%s221 + $0x5c0] sm:$0xff] %v954
        %1159 = vst [vmem:[%s221 + $0x5c8] sm:$0xff] %v955
        %1160 = vst [vmem:[%s221 + $0x5d0] sm:$0xff] %v956
        %1161 = vst [vmem:[%s221 + $0x5d8] sm:$0xff] %v957
        %1162 = vst [vmem:[%s221 + $0x5e0] sm:$0xff] %v958
        %1163 = vst [vmem:[%s221 + $0x5e8] sm:$0xff] %v959
        %1164 = vst [vmem:[%s221 + $0x5f0] sm:$0xff] %v960
        %1165 = vst [vmem:[%s221 + $0x5f8] sm:$0xff] %v961
        %1166 = vst [vmem:[%s221 + $0x600] sm:$0xff] %v962
        %1167 = vst [vmem:[%s221 + $0x608] sm:$0xff] %v963
        %1168 = vst [vmem:[%s221 + $0x610] sm:$0xff] %v964
        %1169 = vst [vmem:[%s221 + $0x618] sm:$0xff] %v965
        %1170 = vst [vmem:[%s221 + $0x620] sm:$0xff] %v966
        %1171 = vst [vmem:[%s221 + $0x628] sm:$0xff] %v967
        %1172 = vst [vmem:[%s221 + $0x630] sm:$0xff] %v968
        %1173 = vst [vmem:[%s221 + $0x638] sm:$0xff] %v969
        %1174 = vst [vmem:[%s221 + $0x640] sm:$0xff] %v970
        %1175 = vst [vmem:[%s221 + $0x648] sm:$0xff] %v971
        %1176 = vst [vmem:[%s221 + $0x650] sm:$0xff] %v972
        %1177 = vst [vmem:[%s221 + $0x658] sm:$0xff] %v973
        %s1178 = sand.u32 %s97, 1
        %s1179 = scalar_lea.sflag [#allocation4], %s1178
        %s1180 = sand.u32 %s97, 1
        %s1181 = smul.addr %s1180, 1632
        %s1182 = scalar_lea.vmem [#allocation8], %s1181
        // Predicated region
        $region45: #{tpu_custom_call.1} parent=31 // pred_check
          %p1183 = pneg %p107
        $region46: #{tpu_custom_call.1} parent=31 // pred_check_branch
          %1185 = sbr.rel (%p1183) target = $region48
        $region47: #{tpu_custom_call.1} parent=31 // pred_region
          %s1186 = smul.u32 17, %s21
          %s1187 = ssub.s32 33, %s1186
          %p1188 = scmp.lt.s32.totalorder %s1187, 17
          %s1189 = scalar_select %p1188, %s1187, 17
          %s1190 = smul.u32 128, %s1189
          %s1191 = smul.u32 %s1190, 12
          %s1193 = ssub.s32 26112, %s1191
          %1194 = vsyncadd %s1179, %s1193
          %p1195 = scmp.ne.s32.totalorder 0, %s1191
          %s1196 = smul.addr %s1186, 12
          %s1197 = smul.addr %s1196, 128
          %s1198 = scalar_lea.hbm %s3, %s1197
          %s1199 = smul.u32 96, %s1189
          %s1200 = sshll.u32 %s1182, 4
          %s1201 = int_to_ptr.vmem [resolvable:$true] %s1200
          %s1202 = sshll.u32 %s1199, 4
          %1206 = dma.vmem_to_hbm [thread:$0]  (%p1195), %s1201, %s1202, %s1198, %s1179, 1536, 1536, 96
        $region48: #{tpu_custom_call.1} parent=31 // pred_fallthru
          _
      $region32: #{tpu_custom_call.1} parent=5 // pred_fallthru
        _
      %p1207 = scmp.le.s32.totalorder 2, %s16
      // Predicated region
      $region49: #{tpu_custom_call.1} parent=5 // pred_check
        %p1208 = pneg %p1207
      $region50: #{tpu_custom_call.1} parent=5 // pred_check_branch
        %1210 = sbr.rel (%p1208) target = $region52
      $region51: #{tpu_custom_call.1} parent=5 // pred_region
        %s1211 = ssub.s32 %s16, 2
        // Predicated region
        $region53: #{tpu_custom_call.1} parent=51 // pred_check
          %p1212 = pneg %p113
        $region54: #{tpu_custom_call.1} parent=51 // pred_check_branch
          %1214 = sbr.rel (%p1212) target = $region56
        $region55: #{tpu_custom_call.1} parent=51 // pred_region
          %s1215 = sand.u32 %s98, 1
          %s1216 = scalar_lea.sflag [#allocation4], %s1215
          %s1217 = sand.u32 %s98, 1
          %s1218 = smul.addr %s1217, 1632
          %s1219 = scalar_lea.vmem [#allocation8], %s1218
          %1220 = dma.done %s1216, 26112
        $region56: #{tpu_custom_call.1} parent=51 // pred_fallthru
          _
      $region52: #{tpu_custom_call.1} parent=5 // pred_fallthru
        _
    $region6: #{tpu_custom_call.1} parent=1 // loop_footer
      %s20 = sadd.s32 1, %s16
    $region7: #{tpu_custom_call.1} parent=1 // loop_footer_branch
      %15 = sbr.rel target = $region3
    $region8: #{tpu_custom_call.1} parent=1 // loop_exit
      _
    %1221 = vsyncpa [#allocation3], 1
    %s1222 = scalar_lea.sflag [#allocation3], 1
    %1223 = vsyncpa %s1222, 1
    %1224 = vsyncpa [#allocation6], 1
    %1225 = vsyncpa [#allocation4], 1
    %s1226 = scalar_lea.sflag [#allocation4], 1
    %1227 = vsyncpa %s1226, 1

</llo_original>
